<compile_context>
chip_gen: v7x
topology: tpu7x:2x2x1
jax: 0.10.0
libtpu: 0.0.40
codegen_flags: <defaults>
</compile_context>

<pallas_src>
import jax
import jax.numpy as jnp
from jax.experimental import pallas as pl
from jax.experimental.pallas import tpu as pltpu


def one_weight_linear_kernel(x_ref, w_ref, wt_ref, b_ref, o_ref):
    x = x_ref[...]                        # (tm, n_feat)
    w = w_ref[...]                        # (n_feat, n_hidden)
    wt = wt_ref[...]                      # (n_hidden, n_feat)  (precomputed w1.T)
    b = b_ref[...]                        # (1, n_feat)

    # First matmul on the MXU with f32 accumulation.
    h = jnp.dot(x, w, preferred_element_type=jnp.float32)           # (tm, n_hidden)
    # Second matmul against the pre-transposed weight: plain (K,N) dot,
    # no in-kernel transpose/relayout ever.
    y = jnp.dot(h, wt, preferred_element_type=jnp.float32)          # (tm, n_feat)

    # Fused epilogue: bias broadcast over rows + ReLU, single store.
    o_ref[...] = jnp.maximum(y + b, 0.0).astype(o_ref.dtype)


def _round_up(x, m):
    return ((x + m - 1) // m) * m


def _pick_row_tile(n_data, n_feat, n_hidden, row_tile, itemsize):
    """Pick the streaming row tile for the grid path."""
    tm = max(8, min(_round_up(row_tile, 8), _round_up(n_data, 8)))

    # v7x has 2 TensorCores; "parallel" sharding + double-buffering only help
    # with enough grid steps.  Keep >= 8 steps when possible.
    MIN_STEPS = 8
    if pl.cdiv(n_data, tm) < MIN_STEPS:
        tm = max(8, _round_up(pl.cdiv(n_data, MIN_STEPS), 8))

    def vmem_bytes(t):
        stream = 2 * 2 * t * n_feat * itemsize                 # 2 bufs x (x blk + out blk)
        resident = 2 * n_feat * n_hidden * itemsize + n_feat * itemsize  # w1 + w1.T + b
        return stream + resident

    # Cap so double-buffered tiles + resident weights fit comfortably on all
    # generations (v7x: 64 MiB physical; v5e: 16 MiB scoped default, raised
    # explicitly below).  Shrink tm (never the feature dims) if over.
    TILED_VMEM_CAP = 24 * 1024 * 1024
    while tm > 8 and vmem_bytes(tm) > TILED_VMEM_CAP:
        tm = max(8, _round_up(tm // 2, 8))
    return tm, vmem_bytes(tm)


def one_weight_linear_net(x, w1, b, *, row_tile=1024,
                          no_grid_vmem_budget=8 * 1024 * 1024):
    """y = relu((x @ w1) @ w1.T + b)."""
    n_data, n_feat = x.shape
    nf_w, n_hidden = w1.shape
    assert nf_w == n_feat, "w1 must be (n_feat, n_hidden)"

    b2d = b.reshape(1, n_feat)
    w1_t = w1.T          # materialized once, wrapper-side; tiny resident operand
    out_shape = jax.ShapeDtypeStruct((n_data, n_feat), x.dtype)

    isz = jnp.dtype(x.dtype).itemsize
    x_bytes = n_data * n_feat * isz
    out_bytes = x_bytes
    w_bytes = n_feat * n_hidden * isz
    b_bytes = n_feat * isz
    total_bytes = x_bytes + out_bytes + 2 * w_bytes + b_bytes

    cost = pl.CostEstimate(
        flops=4 * n_data * n_feat * n_hidden,   # two M*K*N matmuls
        transcendentals=0,
        bytes_accessed=total_bytes,
    )

    # ------------------------------------------------------------------
    # Path 1: whole working set fits a conservative VMEM budget -> no-grid
    # call, everything resident, zero pipeline/per-step overhead.
    # ------------------------------------------------------------------
    if total_bytes <= no_grid_vmem_budget:
        return pl.pallas_call(
            one_weight_linear_kernel,
            out_shape=out_shape,
            in_specs=[
                pl.BlockSpec(memory_space=pltpu.MemorySpace.VMEM),
                pl.BlockSpec(memory_space=pltpu.MemorySpace.VMEM),
                pl.BlockSpec(memory_space=pltpu.MemorySpace.VMEM),
                pl.BlockSpec(memory_space=pltpu.MemorySpace.VMEM),
            ],
            out_specs=pl.BlockSpec(memory_space=pltpu.MemorySpace.VMEM),
            cost_estimate=cost,
        )(x, w1, w1_t, b2d)

    # ------------------------------------------------------------------
    # Path 2: row-tiled streaming.  Weights/bias VMEM-resident via constant
    # index_maps; x/out blocks stream through double-buffered tiles; row axis
    # "parallel" for the v7x 2-TC split.
    # ------------------------------------------------------------------
    tm, tiled_vmem = _pick_row_tile(n_data, n_feat, n_hidden, row_tile, isz)
    grid = (pl.cdiv(n_data, tm),)

    # Explicit scoped-VMEM limit derived from the actual resident set, with
    # headroom; keeps large tiles usable on v5e (16 MiB scoped default) and
    # safe on v7x (64 MiB physical).
    vmem_limit = min(max(int(tiled_vmem * 1.5) + (1 << 20), 16 << 20), 48 << 20)

    return pl.pallas_call(
        one_weight_linear_kernel,
        out_shape=out_shape,
        grid=grid,
        in_specs=[
            pl.BlockSpec((tm, n_feat), lambda i: (i, 0)),
            pl.BlockSpec((n_feat, n_hidden), lambda i: (0, 0)),
            pl.BlockSpec((n_hidden, n_feat), lambda i: (0, 0)),
            pl.BlockSpec((1, n_feat), lambda i: (0, 0)),
        ],
        out_specs=pl.BlockSpec((tm, n_feat), lambda i: (i, 0)),
        cost_estimate=cost,
        compiler_params=pltpu.CompilerParams(
            dimension_semantics=("parallel",),
            vmem_limit_bytes=vmem_limit,
        ),
    )(x, w1, w1_t, b2d)


if __name__ == "__main__":
    key = jax.random.PRNGKey(0)
    k_x, k_w, k_x2 = jax.random.split(key, 3)

    # Small shapes consistent with the module's forward signature.
    n_data, n_feat, n_hidden = 8, 32, 16

    # Deterministic init mirroring nn.init.xavier_normal_:
    # std = gain * sqrt(2 / (fan_in + fan_out)), gain = 1.
    xavier_std = (2.0 / (n_feat + n_hidden)) ** 0.5
    w1 = jax.random.normal(k_w, (n_feat, n_hidden), dtype=jnp.float32) * xavier_std
    b = jnp.zeros((n_feat,), dtype=jnp.float32)

    # --- path 1: small batch, fully VMEM-resident no-grid call ---------------
    x = jax.random.normal(k_x, (n_data, n_feat), dtype=jnp.float32)
    out = jax.block_until_ready(one_weight_linear_net(x, w1, b))
    ref = jnp.maximum((x @ w1) @ w1.T + b, 0.0)
    assert out.shape == (n_data, n_feat)
    assert jnp.allclose(out, ref, atol=1e-5, rtol=1e-5)

    # --- path 2: row-tiled streaming path (forced with a zero no-grid budget
    #     so it is exercised even at this small footprint) --------------------
    n_big = 1024
    x_big = jax.random.normal(k_x2, (n_big, n_feat), dtype=jnp.float32)
    out_big = jax.block_until_ready(
        one_weight_linear_net(x_big, w1, b, row_tile=1024, no_grid_vmem_budget=0))
    ref_big = jnp.maximum((x_big @ w1) @ w1.T + b, 0.0)
    assert out_big.shape == (n_big, n_feat)
    assert jnp.allclose(out_big, ref_big, atol=1e-5, rtol=1e-5)

    # Default dispatch on the 1024-row case now takes the no-grid resident
    # path (working set ~260 KB << budget); verify it too.
    out_big2 = jax.block_until_ready(one_weight_linear_net(x_big, w1, b))
    assert jnp.allclose(out_big2, ref_big, atol=1e-5, rtol=1e-5)

    print("KERNEL_OK")
</pallas_src>

<mosaic_0001>
module attributes {stable_mosaic.version = 11 : i64} {
  func.func @one_weight_linear_kernel(%arg0: memref<8x32xf32, #tpu.memory_space<vmem>>, %arg1: memref<32x16xf32, #tpu.memory_space<vmem>>, %arg2: memref<16x32xf32, #tpu.memory_space<vmem>>, %arg3: memref<1x32xf32, #tpu.memory_space<vmem>>, %arg4: memref<8x32xf32, #tpu.memory_space<vmem>>) attributes {dimension_semantics = [], scalar_prefetch = 0 : i64, scratch_operands = 0 : i64, tpu.core_type = #tpu.core_type<tc>} {
    %c0 = arith.constant 0 : index
    %c0_0 = arith.constant 0 : index
    %0 = vector.load %arg0[%c0, %c0_0] : memref<8x32xf32, #tpu.memory_space<vmem>>, vector<8x32xf32>
    %c0_1 = arith.constant 0 : index
    %c0_2 = arith.constant 0 : index
    %1 = vector.load %arg1[%c0_1, %c0_2] : memref<32x16xf32, #tpu.memory_space<vmem>>, vector<32x16xf32>
    %c0_3 = arith.constant 0 : index
    %c0_4 = arith.constant 0 : index
    %2 = vector.load %arg2[%c0_3, %c0_4] : memref<16x32xf32, #tpu.memory_space<vmem>>, vector<16x32xf32>
    %c0_5 = arith.constant 0 : index
    %c0_6 = arith.constant 0 : index
    %3 = vector.load %arg3[%c0_5, %c0_6] : memref<1x32xf32, #tpu.memory_space<vmem>>, vector<1x32xf32>
    %cst = arith.constant dense<0.000000e+00> : vector<8x16xf32>
    %4 = tpu.matmul %0, %1, %cst {dimension_numbers = #tpu.dot_dimension_numbers<[1], [0], [0], [1], [0, 0, 1, 1], [], []>} : vector<8x32xf32>, vector<32x16xf32>, vector<8x16xf32> -> vector<8x16xf32>
    %cst_7 = arith.constant dense<0.000000e+00> : vector<8x32xf32>
    %5 = tpu.matmul %4, %2, %cst_7 {dimension_numbers = #tpu.dot_dimension_numbers<[1], [0], [0], [1], [0, 0, 1, 1], [], []>} : vector<8x16xf32>, vector<16x32xf32>, vector<8x32xf32> -> vector<8x32xf32>
    %6 = vector.broadcast %3 : vector<1x32xf32> to vector<8x32xf32>
    %7 = arith.addf %5, %6 : vector<8x32xf32>
    %cst_8 = arith.constant 0.000000e+00 : f32
    %8 = vector.broadcast %cst_8 : f32 to vector<8x32xf32>
    %9 = arith.maximumf %7, %8 : vector<8x32xf32>
    %c0_9 = arith.constant 0 : index
    %c0_10 = arith.constant 0 : index
    %10 = vector.load %arg4[%c0_9, %c0_10] : memref<8x32xf32, #tpu.memory_space<vmem>>, vector<8x32xf32>
    tpu.vector_store %arg4[%c0_9, %c0_10], %9 {strides = array<i32>} : memref<8x32xf32, #tpu.memory_space<vmem>>, vector<8x32xf32>,
    return
  }
}

</mosaic_0001>

<llo_original>
// kernel: tpu_custom_call.1
$region0: #{tpu_custom_call.1}
  #allocation0 [shape = 'u32[]', space=smem, size = 0x4, offset = 0x4, fixed_abs, tag = 'smem constant byte address 0x4 - core index']
  #allocation1 [shape = 'u32[144,128]{1,0:T(1,128)}', space=vmem, size = 0x12000, scoped, tag = 'internal scratch']
  %s0 = inlined_call_operand.vmem [shape: f32[8,32], index: 0, kind: input, shape index: {}]
  %s1 = inlined_call_operand.vmem [shape: f32[32,16], index: 1, kind: input, shape index: {}]
  %s2 = inlined_call_operand.vmem [shape: f32[16,32], index: 2, kind: input, shape index: {}]
  %s3 = inlined_call_operand.vmem [shape: f32[1,32], index: 3, kind: input, shape index: {}]
  %s4 = inlined_call_operand.hbm [shape: f32[8,32], index: 4, kind: output, shape index: {}]
  %s5 = sld [smem:[#allocation0]]
  $region26: #{tpu_custom_call.1} parent=0
    _
  %s7 = ssub.s32 1, %s5
  %s8 = scalar_select 0, %s7, %s5
  $region1: #{tpu_custom_call.1} parent=0
    #allocation2 [shape = 'u8[4096]{0}', space=vmem, size = 0x1000, scoped, tag = 'output window, operand 0, single buffered']
    #allocation3 [shape = 's32[1]{0}', space=sflag, size = 0x4, scoped, tag = 'scoped memory for tpu_custom_call.1']
    %9 = vsyncpa [#allocation3], 0
    // Predicated region
    $region2: #{tpu_custom_call.1} parent=1 // pred_check
      _
    $region3: #{tpu_custom_call.1} parent=1 // pred_check_branch
      %11 = sbr.rel (0) target = $region5
    $region4: #{tpu_custom_call.1} parent=1 // pred_region
      _
    $region5: #{tpu_custom_call.1} parent=1 // pred_fallthru
      _
    // Predicated region
    $region6: #{tpu_custom_call.1} parent=1 // pred_check
      _
    $region7: #{tpu_custom_call.1} parent=1 // pred_check_branch
      %13 = sbr.rel (0) target = $region9
    $region8: #{tpu_custom_call.1} parent=1 // pred_region
      _
    $region9: #{tpu_custom_call.1} parent=1 // pred_fallthru
      _
    // Predicated region
    $region10: #{tpu_custom_call.1} parent=1 // pred_check
      _
    $region11: #{tpu_custom_call.1} parent=1 // pred_check_branch
      %15 = sbr.rel (0) target = $region13
    $region12: #{tpu_custom_call.1} parent=1 // pred_region
      _
    $region13: #{tpu_custom_call.1} parent=1 // pred_fallthru
      _
    // Predicated region
    $region14: #{tpu_custom_call.1} parent=1 // pred_check
      _
    $region15: #{tpu_custom_call.1} parent=1 // pred_check_branch
      %17 = sbr.rel (0) target = $region17
    $region16: #{tpu_custom_call.1} parent=1 // pred_region
      _
    $region17: #{tpu_custom_call.1} parent=1 // pred_fallthru
      _
    %v18 = vld [vmem:[%s0] sm:$0xff]
    %v19 = vld [vmem:[%s1] sm:$0xff]
    %v20 = vld [vmem:[%s1 + $0x8] sm:$0xff]
    %v21 = vld [vmem:[%s1 + $0x10] sm:$0xff]
    %v22 = vld [vmem:[%s1 + $0x18] sm:$0xff]
    %v23 = vld [vmem:[%s2] sm:$0xff]
    %v24 = vld [vmem:[%s2 + $0x8] sm:$0xff]
    %v25 = vld [vmem:[%s3] sm:$0x1]
    %vm26 = vcmask 261120
    %v28 = vsel %vm26, %v18, 0
    %30 = vmatprep.subr.mxu0 0.0
    %31 = vmatpush1.msra.mxu0 %v19
    %32 = vmatprep.subr.mxu0 0.0
    %33 = vmatpush1.msra.mxu0 %v20
    %34 = vmatprep.subr.mxu0 0.0
    %35 = vmatpush1.msra.mxu0 %v21
    %36 = vmatprep.subr.mxu0 0.0
    %37 = vmatpush1.msra.mxu0 %v22
    %38 = vmatprep.subr.mxu0 0.0
    %39 = vmatpush1.msra.mxu0 0.0
    %40 = vmatprep.subr.mxu0 0.0
    %41 = vmatpush1.msra.mxu0 0.0
    %42 = vmatprep.subr.mxu0 0.0
    %43 = vmatpush1.msra.mxu0 0.0
    %44 = vmatprep.subr.mxu0 0.0
    %45 = vmatpush1.msra.mxu0 0.0
    %46 = vmatprep.subr.mxu0 0.0
    %47 = vmatpush1.msra.mxu0 0.0
    %48 = vmatprep.subr.mxu0 0.0
    %49 = vmatpush1.msra.mxu0 0.0
    %50 = vmatprep.subr.mxu0 0.0
    %51 = vmatpush1.msra.mxu0 0.0
    %52 = vmatprep.subr.mxu0 0.0
    %53 = vmatpush1.msra.mxu0 0.0
    %54 = vmatprep.subr.mxu0 0.0
    %55 = vmatpush1.msra.mxu0 0.0
    %56 = vmatprep.subr.mxu0 0.0
    %57 = vmatpush1.msra.mxu0 0.0
    %58 = vmatprep.subr.mxu0 0.0
    %59 = vmatpush1.msra.mxu0 0.0
    %60 = vmatprep.subr.mxu0 0.0
    %61 = vmatpush1.msra.mxu0 0.0
    %62 = vmatprep.subr.mxu0 0.0
    %63 = vmatpush1.msra.mxu0 0.0
    %64 = vmatprep.subr.mxu0 0.0
    %65 = vmatpush1.msra.mxu0 0.0
    %66 = vmatprep.subr.mxu0 0.0
    %67 = vmatpush1.msra.mxu0 0.0
    %68 = vmatprep.subr.mxu0 0.0
    %69 = vmatpush1.msra.mxu0 0.0
    %70 = vmatprep.subr.mxu0 0.0
    %71 = vmatpush1.msra.mxu0 0.0
    %72 = vmatprep.subr.mxu0 0.0
    %73 = vmatpush1.msra.mxu0 0.0
    %74 = vmatprep.subr.mxu0 0.0
    %75 = vmatpush1.msra.mxu0 0.0
    %76 = vmatprep.subr.mxu0 0.0
    %77 = vmatpush1.msra.mxu0 0.0
    %78 = vmatprep.subr.mxu0 0.0
    %79 = vmatpush1.msra.mxu0 0.0
    %80 = vmatprep.subr.mxu0 0.0
    %81 = vmatpush1.msra.mxu0 0.0
    %82 = vmatprep.subr.mxu0 0.0
    %83 = vmatpush1.msra.mxu0 0.0
    %84 = vmatprep.subr.mxu0 0.0
    %85 = vmatpush1.msra.mxu0 0.0
    %86 = vmatprep.subr.mxu0 0.0
    %87 = vmatpush1.msra.mxu0 0.0
    %88 = vmatprep.subr.mxu0 0.0
    %89 = vmatpush1.msra.mxu0 0.0
    %90 = vmatprep.subr.mxu0 0.0
    %91 = vmatpush1.msra.mxu0 0.0
    %92 = vmatprep.subr.mxu0 0.0
    %93 = vmatpush1.msra.mxu0 0.0
    %94 = vmatprep.mubr.f32.mxu0 0.0
    %95 = vmatmul.mubr.f32.gmra.mrb[0].mxu0 %v28
    %v96 = vpop.f32.mrb[0].mxu0
    %v97 = vadd.f32 0.0, %v96
    %v98 = vpop.f32.mrb[0].mxu0
    %99 = vdwg.mxu0
    %v101 = vlaneseq
    %v102 = vshrl.u32 %v101, 7
    %v103 = vsub.s32 0, %v102
    %v104 = vrot.slane %v25, %v103
    %vm106 = vcmask 130048
    %v108 = vsel %vm106, %v97, 0
    %110 = vmatprep.subr.mxu0 0.0
    %111 = vmatpush1.msra.mxu0 %v23
    %112 = vmatprep.subr.mxu0 0.0
    %113 = vmatpush1.msra.mxu0 %v24
    %114 = vmatprep.subr.mxu0 0.0
    %115 = vmatpush1.msra.mxu0 0.0
    %116 = vmatprep.subr.mxu0 0.0
    %117 = vmatpush1.msra.mxu0 0.0
    %118 = vmatprep.subr.mxu0 0.0
    %119 = vmatpush1.msra.mxu0 0.0
    %120 = vmatprep.subr.mxu0 0.0
    %121 = vmatpush1.msra.mxu0 0.0
    %122 = vmatprep.subr.mxu0 0.0
    %123 = vmatpush1.msra.mxu0 0.0
    %124 = vmatprep.subr.mxu0 0.0
    %125 = vmatpush1.msra.mxu0 0.0
    %126 = vmatprep.subr.mxu0 0.0
    %127 = vmatpush1.msra.mxu0 0.0
    %128 = vmatprep.subr.mxu0 0.0
    %129 = vmatpush1.msra.mxu0 0.0
    %130 = vmatprep.subr.mxu0 0.0
    %131 = vmatpush1.msra.mxu0 0.0
    %132 = vmatprep.subr.mxu0 0.0
    %133 = vmatpush1.msra.mxu0 0.0
    %134 = vmatprep.subr.mxu0 0.0
    %135 = vmatpush1.msra.mxu0 0.0
    %136 = vmatprep.subr.mxu0 0.0
    %137 = vmatpush1.msra.mxu0 0.0
    %138 = vmatprep.subr.mxu0 0.0
    %139 = vmatpush1.msra.mxu0 0.0
    %140 = vmatprep.subr.mxu0 0.0
    %141 = vmatpush1.msra.mxu0 0.0
    %142 = vmatprep.subr.mxu0 0.0
    %143 = vmatpush1.msra.mxu0 0.0
    %144 = vmatprep.subr.mxu0 0.0
    %145 = vmatpush1.msra.mxu0 0.0
    %146 = vmatprep.subr.mxu0 0.0
    %147 = vmatpush1.msra.mxu0 0.0
    %148 = vmatprep.subr.mxu0 0.0
    %149 = vmatpush1.msra.mxu0 0.0
    %150 = vmatprep.subr.mxu0 0.0
    %151 = vmatpush1.msra.mxu0 0.0
    %152 = vmatprep.subr.mxu0 0.0
    %153 = vmatpush1.msra.mxu0 0.0
    %154 = vmatprep.subr.mxu0 0.0
    %155 = vmatpush1.msra.mxu0 0.0
    %156 = vmatprep.subr.mxu0 0.0
    %157 = vmatpush1.msra.mxu0 0.0
    %158 = vmatprep.subr.mxu0 0.0
    %159 = vmatpush1.msra.mxu0 0.0
    %160 = vmatprep.subr.mxu0 0.0
    %161 = vmatpush1.msra.mxu0 0.0
    %162 = vmatprep.subr.mxu0 0.0
    %163 = vmatpush1.msra.mxu0 0.0
    %164 = vmatprep.subr.mxu0 0.0
    %165 = vmatpush1.msra.mxu0 0.0
    %166 = vmatprep.subr.mxu0 0.0
    %167 = vmatpush1.msra.mxu0 0.0
    %168 = vmatprep.subr.mxu0 0.0
    %169 = vmatpush1.msra.mxu0 0.0
    %170 = vmatprep.subr.mxu0 0.0
    %171 = vmatpush1.msra.mxu0 0.0
    %172 = vmatprep.subr.mxu0 0.0
    %173 = vmatpush1.msra.mxu0 0.0
    %174 = vmatprep.mubr.f32.mxu0 0.0
    %175 = vmatmul.mubr.f32.gmra.mrb[0].mxu0 %v108
    %v176 = vpop.f32.mrb[0].mxu0
    %v177 = vadd.f32 %v104, %v176
    %v178 = vpop.f32.mrb[0].mxu0
    %179 = vdwg.mxu0
    %v180 = vmax.f32 %v177, 0.0
    %181 = vst.msk [vmem:[#allocation2] sm:$0xff] %vm26, %v180
    // Predicated region
    $region18: #{tpu_custom_call.1} parent=1 // pred_check
      _
    $region19: #{tpu_custom_call.1} parent=1 // pred_check_branch
      %183 = sbr.rel (0) target = $region21
    $region20: #{tpu_custom_call.1} parent=1 // pred_region
      %s185 = ssub.s32 128, 128
      %186 = vsyncadd [#allocation3], %s185
      %s188 = sshll.u32 [#allocation2], 4
      %s189 = int_to_ptr.vmem [resolvable:$true] %s188
      %191 = dma.vmem_to_hbm [thread:$0]  %s189, 128, %s4, [#allocation3]
    $region21: #{tpu_custom_call.1} parent=1 // pred_fallthru
      _
    // Predicated region
    $region22: #{tpu_custom_call.1} parent=1 // pred_check
      _
    $region23: #{tpu_custom_call.1} parent=1 // pred_check_branch
      %193 = sbr.rel (0) target = $region25
    $region24: #{tpu_custom_call.1} parent=1 // pred_region
      %194 = dma.done [#allocation3], 128
    $region25: #{tpu_custom_call.1} parent=1 // pred_fallthru
      _
    %195 = vsyncpa [#allocation3], 1

</llo_original>
